<compile_context>
chip_gen: v7x
topology: tpu7x:2x2x1
jax: 0.10.0
libtpu: 0.0.40
codegen_flags: <defaults>
</compile_context>

<pallas_src>
import functools

import jax
import jax.numpy as jnp
from jax.experimental import pallas as pl
from jax.experimental.pallas import tpu as pltpu


# ---------------------------------------------------------------------------
# In-kernel helpers (operate on VMEM values)
# ---------------------------------------------------------------------------

def _recip(d, nr_iters=2):
    """Reciprocal on the EUP (approx) + Newton refinement.

    approx=True keeps the divide off the busy VALU slot; two NR steps bring the
    relative error down to ~f32 rounding, preserving parity with the exact
    division in the PyTorch module well below the test tolerance.
    """
    y = pl.reciprocal(d, approx=True)
    for _ in range(nr_iters):
        y = y * (2.0 - d * y)
    return y


def _normalized_tap_weights(sigma, K):
    """gsn[a] = gk(a) / sum_t gk(t) for a = 0..K (using g(t) == g(-t)).

    The safe_div normalization depends only on sigma at the output pixel, so it
    is folded into the weights once (shared by both fused passes), replacing
    two C*H*W broadcast multiplies with (K+1) H*W multiplies.
    NOTE: sigma == 0 yields NaN exactly like the PyTorch exp(-0/0); no epsilon.
    """
    two_sigma_sq = 2.0 * sigma * sigma
    half_step = jnp.ceil(2.0 * sigma)
    neg_inv = -_recip(two_sigma_sq)          # hoisted out of the tap loop
    gs = []
    norm = None
    for a in range(K + 1):
        af = float(a)
        g = jnp.exp((af * af) * neg_inv)
        g = jnp.where(af <= half_step, g, jnp.zeros_like(g))  # truncation
        gs.append(g)
        contrib = g if a == 0 else 2.0 * g   # g(t) == g(-t)
        norm = contrib if norm is None else norm + contrib
    inv_norm = jnp.where(jnp.abs(norm) > 1e-8, _recip(norm),
                         jnp.zeros_like(norm))                  # safe_div
    return [g * inv_norm for g in gs]


def _pad_edge_w(v, k):
    """Edge-replicate pad by k on both sides of the last (lane / W) axis."""
    if k == 0:
        return v
    left = jnp.broadcast_to(v[..., :1], v.shape[:-1] + (k,))
    right = jnp.broadcast_to(v[..., -1:], v.shape[:-1] + (k,))
    return jnp.concatenate([left, v, right], axis=-1)


def _pad_edge_h(v, k):
    """Edge-replicate pad by k on both sides of the sublane / H axis."""
    if k == 0:
        return v
    top = jnp.broadcast_to(v[..., :1, :], v.shape[:-2] + (k, v.shape[-1]))
    bot = jnp.broadcast_to(v[..., -1:, :], v.shape[:-2] + (k, v.shape[-1]))
    return jnp.concatenate([top, v, bot], axis=-2)


def _blur_general(v, gsn, K, dx, dy):
    """Symmetric weighted tap sum along integer direction (dx, dy).

    Edge-pad + static slices; used for the sublane (H) direction, for diagonal
    directions, and as the fallback when the block is not (8,128)-aligned.
    """
    H, W = v.shape[-2], v.shape[-1]
    ph, pw = K * abs(dy), K * abs(dx)
    vp = _pad_edge_h(_pad_edge_w(v, pw), ph)
    acc = v * gsn[0]
    for a in range(1, K + 1):
        hp, wp = ph + a * dy, pw + a * dx
        hm, wm = ph - a * dy, pw - a * dx
        plus = vp[..., hp:hp + H, wp:wp + W]
        minus = vp[..., hm:hm + H, wm:wm + W]
        acc = acc + (plus + minus) * gsn[a]                  # g(t) == g(-t)
    return acc


def _blur_w_roll(v, gsn, K, step):
    """Lane(W)-axis taps via XLU rotations + border-clamp fixup masks.

    No padded buffer and no lane-misaligned slice copies: the shift goes to the
    XLU slot and the clamp is a cheap VPU select. The block is rolled as a
    fully (8,128)-aligned 2-D (rows, W) view; wrapped lanes are overwritten by
    the edge value, so only the non-wrapped (exactly shifted) lanes matter.
    """
    nd = v.ndim
    W = v.shape[-1]
    edge_lo = v[..., :1]                                  # clamp-at-0 value
    edge_hi = v[..., -1:]                                 # clamp-at-(W-1) value
    w_idx = jax.lax.broadcasted_iota(jnp.int32, (1,) * (nd - 1) + (W,), nd - 1)
    v2 = v.reshape(-1, W)          # no-op collapse (H % 8 == 0 on this path)
    acc = v * gsn[0]
    for a in range(1, K + 1):
        sh = a * step
        if sh >= W:                # entire row clamps to the border
            plus = jnp.broadcast_to(edge_hi, v.shape)
            minus = jnp.broadcast_to(edge_lo, v.shape)
        else:
            plus = pltpu.roll(v2, W - sh, 1).reshape(v.shape)   # v[.., w + sh]
            plus = jnp.where(w_idx >= W - sh, edge_hi, plus)
            minus = pltpu.roll(v2, sh, 1).reshape(v.shape)      # v[.., w - sh]
            minus = jnp.where(w_idx < sh, edge_lo, minus)
        acc = acc + (plus + minus) * gsn[a]
    return acc


def _blur_w(v, gsn, K, step=1):
    """Blur along W: roll fast path when the block is (8,128)-aligned."""
    H, W = v.shape[-2], v.shape[-1]
    if W % 128 == 0 and H % 8 == 0:
        return _blur_w_roll(v, gsn, K, step)
    # TODO(synk): small / non-native blocks keep the validated pad+slice path.
    return _blur_general(v, gsn, K, dx=step, dy=0)


def _blur_h(v, gsn, K, step=1):
    # Sublane-axis slices are lane-aligned (cheap per-vreg sublane shifts);
    # dynamic sublane rotates have narrower Mosaic support, so roll is
    # reserved for the lane axis.
    return _blur_general(v, gsn, K, dx=0, dy=step)


# ---------------------------------------------------------------------------
# Kernels
# ---------------------------------------------------------------------------

def _gauss2d_dir_kernel(x_ref, sig_ref, o_ref, *, K, dx, dy, scale):
    """Single-direction Gauss2DEffect (one PyTorch module forward)."""
    x = x_ref[...].astype(jnp.float32)                  # (1, Ct, H, W)
    sigma = sig_ref[...].astype(jnp.float32) * scale    # (1, 1, H, W)
    gsn = _normalized_tap_weights(sigma, K)
    if dy == 0 and dx != 0:
        out = _blur_w(x, gsn, K, step=abs(dx))
    elif dx == 0 and dy != 0:
        out = _blur_h(x, gsn, K, step=abs(dy))
    else:
        # TODO(synk): diagonal integer directions stay on the generic path.
        out = _blur_general(x, gsn, K, dx=dx, dy=dy)
    o_ref[...] = out.astype(o_ref.dtype)


def _gauss2d_xy_kernel(x_ref, sig_ref, o_ref, *, K, scale):
    """Fused XY-separated blur: W-pass then H-pass in one kernel.

    Equivalent to applying the module twice (dxdy=[1,0] then [0,1]) with the
    same sigma map; the intermediate never leaves VMEM and the normalized tap
    weights are computed once and shared by both passes.
    """
    x = x_ref[...].astype(jnp.float32)                  # (1, Ct, H, W)
    sigma = sig_ref[...].astype(jnp.float32) * scale    # (1, 1, H, W)
    gsn = _normalized_tap_weights(sigma, K)
    t1 = _blur_w(x, gsn, K)                             # blur along W (lanes)
    out = _blur_h(t1, gsn, K)                           # blur along H (sublanes)
    o_ref[...] = out.astype(o_ref.dtype)


# ---------------------------------------------------------------------------
# Wrappers
# ---------------------------------------------------------------------------

@functools.lru_cache(maxsize=None)
def _vmem_limit_bytes():
    """Generation-aware VMEM cap: ~3/4 of physical (96 MiB on v5e/v6e's
    128 MiB, 48 MiB on v7x's 64 MiB), clamped to [32, 96] MiB; conservative
    32 MiB fallback if the query is unavailable."""
    try:
        cap = int(pltpu.get_tpu_info().vmem_capacity_bytes)
        lim = (cap * 3) // 4
    except Exception:
        lim = 32 * 1024 * 1024
    return max(32 * 1024 * 1024, min(lim, 96 * 1024 * 1024))


def _pick_c_tile(n_batch, C, H, W, vmem_limit):
    """Largest divisor of C whose f32 working set fits a slice of the VMEM
    budget, shrunk further (when possible) until the grid has >= 4 steps so the
    auto-pipeline overlaps DMA with compute and both v7x TCs get work."""
    per_chan = 8 * H * W * 4          # ~8 live f32 (H, W) planes per channel
    budget = max(vmem_limit // 4, 1 << 20)
    divisors = sorted(d for d in range(1, C + 1) if C % d == 0)
    ct = max([d for d in divisors if d * per_chan <= budget] or [1])
    while ct > 1 and n_batch * (C // ct) < 4:
        ct = max(d for d in divisors if d < ct)
    return ct


def _run(kernel, x, sigma):
    N, C, H, W = x.shape
    ct = _pick_c_tile(N, C, H, W, _vmem_limit_bytes())
    # TODO(synk): for production use, pad W wrapper-side to a multiple of 128
    # so the output stores stay lane-dense (demo below already uses W=128).
    return pl.pallas_call(
        kernel,
        out_shape=jax.ShapeDtypeStruct((N, C, H, W), x.dtype),
        grid=(N, C // ct),
        in_specs=[
            pl.BlockSpec((1, ct, H, W), lambda n, c: (n, c, 0, 0)),
            pl.BlockSpec((1, 1, H, W), lambda n, c: (n, 0, 0, 0)),
        ],
        out_specs=pl.BlockSpec((1, ct, H, W), lambda n, c: (n, c, 0, 0)),
        compiler_params=pltpu.CompilerParams(
            dimension_semantics=("parallel", "parallel"),
            vmem_limit_bytes=_vmem_limit_bytes(),
        ),
    )(x, sigma)


def gauss2d_effect(x, sigma, dxdy, dim_kernsize,
                   precision_factor=1.0, input_size_factor=1.0):
    """Directional Gaussian blur with per-pixel sigma (one module forward).

    x: (N, C, H, W); sigma: (N, 1, H, W); dxdy: integer pixel-space direction.
    """
    # TODO(synk): IndexHelper.input_size_factor()/tex_size() internals are not
    # provided; sigma is scaled by input_size_factor * precision_factor and
    # dxdy is interpreted as an integer pixel-space direction with
    # border-clamped sampling (non-integer offsets would need bilinear
    # grid_sample, not implemented here).
    dx, dy = int(round(float(dxdy[0]))), int(round(float(dxdy[1])))
    K = int(dim_kernsize)
    scale = float(input_size_factor) * float(precision_factor)
    kernel = functools.partial(_gauss2d_dir_kernel, K=K, dx=dx, dy=dy, scale=scale)
    return _run(kernel, x, sigma)


def gauss2d_xy_separated(x, sigma, dim_kernsize,
                         precision_factor=1.0, input_size_factor=1.0):
    """Fused separable 2D blur: blur along W then along H in one pallas_call."""
    K = int(dim_kernsize)
    scale = float(input_size_factor) * float(precision_factor)
    kernel = functools.partial(_gauss2d_xy_kernel, K=K, scale=scale)
    return _run(kernel, x, sigma)


# ---------------------------------------------------------------------------
# Pure-JAX reference (identical semantics, clamped sampling)
# ---------------------------------------------------------------------------

def _gauss2d_reference(x, sigma, dxdy, K):
    N, C, H, W = x.shape
    dx, dy = int(round(float(dxdy[0]))), int(round(float(dxdy[1])))
    two_sigma_sq = 2.0 * sigma * sigma
    half_step = jnp.ceil(2.0 * sigma)
    acc = jnp.zeros_like(x)
    norm = jnp.zeros_like(sigma)
    hh = jnp.arange(H)
    ww = jnp.arange(W)
    for t in range(-K, K + 1):
        tf = float(t)
        g = jnp.exp(-(tf * tf) / two_sigma_sq)
        g = jnp.where((tf >= -half_step) & (tf <= half_step), g, 0.0)
        hi = jnp.clip(hh + t * dy, 0, H - 1)
        wi = jnp.clip(ww + t * dx, 0, W - 1)
        samp = x[:, :, hi, :][:, :, :, wi]
        acc = acc + samp * g
        norm = norm + g
    return jnp.where(jnp.abs(norm) > 1e-8, acc / norm, 0.0)


if __name__ == "__main__":
    key = jax.random.PRNGKey(0)
    kx, ks = jax.random.split(key)

    # Small but lane-dense shapes: W = 128 (multiple of 128 -> unmasked stores,
    # roll fast path), H = 32 (multiple of 8).
    N, C, H, W = 2, 4, 32, 128
    dim_kernsize = 4  # 2*K + 1 = 9 taps

    x = jax.random.normal(kx, (N, C, H, W), dtype=jnp.float32)
    sigma = jax.random.uniform(ks, (N, 1, H, W), dtype=jnp.float32,
                               minval=0.5, maxval=2.5)

    # Single-direction module semantics (blur along W).
    blur_w = gauss2d_effect(x, sigma, dxdy=[1.0, 0.0], dim_kernsize=dim_kernsize)
    blur_w = jax.block_until_ready(blur_w)
    ref_w = _gauss2d_reference(x, sigma, [1.0, 0.0], dim_kernsize)
    assert blur_w.shape == (N, C, H, W)
    assert jnp.max(jnp.abs(blur_w - ref_w)) < 1e-4

    # Fused XY-separated blur: one pallas_call == two sequential module calls.
    blur_xy = gauss2d_xy_separated(x, sigma, dim_kernsize=dim_kernsize)
    blur_xy = jax.block_until_ready(blur_xy)
    ref_xy = _gauss2d_reference(ref_w, sigma, [0.0, 1.0], dim_kernsize)
    assert blur_xy.shape == (N, C, H, W)
    assert jnp.max(jnp.abs(blur_xy - ref_xy)) < 1e-4

    print("KERNEL_OK")
</pallas_src>

<mosaic_0001>
module attributes {stable_mosaic.version = 11 : i64} {
  func.func @_gauss2d_dir_kernel(%arg0: i32, %arg1: i32, %arg2: memref<1x2x32x128xf32, #tpu.memory_space<vmem>>, %arg3: memref<1x1x32x128xf32, #tpu.memory_space<vmem>>, %arg4: memref<1x2x32x128xf32, #tpu.memory_space<vmem>>) attributes {dimension_semantics = [#tpu.dimension_semantics<parallel>, #tpu.dimension_semantics<parallel>], iteration_bounds = array<i64: 2, 2>, scalar_prefetch = 0 : i64, scratch_operands = 0 : i64, tpu.core_type = #tpu.core_type<tc>, window_params = [{transform_indices = @transform_0, window_bounds = array<i64: 1, 2, 32, 128>}, {transform_indices = @transform_1, window_bounds = array<i64: 1, 1, 32, 128>}, {transform_indices = @transform_2, window_bounds = array<i64: 1, 2, 32, 128>}]} {
    %c0 = arith.constant 0 : index
    %c0_0 = arith.constant 0 : index
    %c0_1 = arith.constant 0 : index
    %c0_2 = arith.constant 0 : index
    %0 = vector.load %arg2[%c0, %c0_0, %c0_1, %c0_2] : memref<1x2x32x128xf32, #tpu.memory_space<vmem>>, vector<1x2x32x128xf32>
    %c0_3 = arith.constant 0 : index
    %c0_4 = arith.constant 0 : index
    %c0_5 = arith.constant 0 : index
    %c0_6 = arith.constant 0 : index
    %1 = vector.load %arg3[%c0_3, %c0_4, %c0_5, %c0_6] : memref<1x1x32x128xf32, #tpu.memory_space<vmem>>, vector<1x1x32x128xf32>
    %cst = arith.constant 1.000000e+00 : f32
    %2 = vector.broadcast %cst : f32 to vector<1x1x32x128xf32>
    %3 = arith.mulf %1, %2 : vector<1x1x32x128xf32>
    %cst_7 = arith.constant 2.000000e+00 : f32
    %4 = vector.broadcast %cst_7 : f32 to vector<1x1x32x128xf32>
    %5 = arith.mulf %4, %3 : vector<1x1x32x128xf32>
    %6 = arith.mulf %5, %3 : vector<1x1x32x128xf32>
    %cst_8 = arith.constant 2.000000e+00 : f32
    %7 = vector.broadcast %cst_8 : f32 to vector<1x1x32x128xf32>
    %8 = arith.mulf %7, %3 : vector<1x1x32x128xf32>
    %9 = math.ceil %8 : vector<1x1x32x128xf32>
    %10 = tpu.reciprocal %6 {approx = true} : vector<1x1x32x128xf32> -> vector<1x1x32x128xf32>
    %11 = arith.mulf %6, %10 : vector<1x1x32x128xf32>
    %cst_9 = arith.constant 2.000000e+00 : f32
    %12 = vector.broadcast %cst_9 : f32 to vector<1x1x32x128xf32>
    %13 = arith.subf %12, %11 : vector<1x1x32x128xf32>
    %14 = arith.mulf %10, %13 : vector<1x1x32x128xf32>
    %15 = arith.mulf %6, %14 : vector<1x1x32x128xf32>
    %cst_10 = arith.constant 2.000000e+00 : f32
    %16 = vector.broadcast %cst_10 : f32 to vector<1x1x32x128xf32>
    %17 = arith.subf %16, %15 : vector<1x1x32x128xf32>
    %18 = arith.mulf %14, %17 : vector<1x1x32x128xf32>
    %cst_11 = arith.constant 0.000000e+00 : f32
    %19 = vector.broadcast %cst_11 : f32 to vector<1x1x32x128xf32>
    %20 = arith.subf %19, %18 : vector<1x1x32x128xf32>
    %cst_12 = arith.constant 0.000000e+00 : f32
    %21 = vector.broadcast %cst_12 : f32 to vector<1x1x32x128xf32>
    %22 = arith.mulf %21, %20 : vector<1x1x32x128xf32>
    %23 = math.exp %22 : vector<1x1x32x128xf32>
    %cst_13 = arith.constant 0.000000e+00 : f32
    %24 = vector.broadcast %cst_13 : f32 to vector<1x1x32x128xf32>
    %25 = arith.cmpf oge, %9, %24 : vector<1x1x32x128xf32>
    %cst_14 = arith.constant 0.000000e+00 : f32
    %26 = vector.broadcast %cst_14 : f32 to vector<1x1x32x128xf32>
    %27 = arith.select %25, %23, %26 : vector<1x1x32x128xi1>, vector<1x1x32x128xf32>
    %cst_15 = arith.constant 1.000000e+00 : f32
    %28 = vector.broadcast %cst_15 : f32 to vector<1x1x32x128xf32>
    %29 = arith.mulf %28, %20 : vector<1x1x32x128xf32>
    %30 = math.exp %29 : vector<1x1x32x128xf32>
    %cst_16 = arith.constant 1.000000e+00 : f32
    %31 = vector.broadcast %cst_16 : f32 to vector<1x1x32x128xf32>
    %32 = arith.cmpf oge, %9, %31 : vector<1x1x32x128xf32>
    %cst_17 = arith.constant 0.000000e+00 : f32
    %33 = vector.broadcast %cst_17 : f32 to vector<1x1x32x128xf32>
    %34 = arith.select %32, %30, %33 : vector<1x1x32x128xi1>, vector<1x1x32x128xf32>
    %cst_18 = arith.constant 2.000000e+00 : f32
    %35 = vector.broadcast %cst_18 : f32 to vector<1x1x32x128xf32>
    %36 = arith.mulf %35, %34 : vector<1x1x32x128xf32>
    %37 = arith.addf %27, %36 : vector<1x1x32x128xf32>
    %cst_19 = arith.constant 4.000000e+00 : f32
    %38 = vector.broadcast %cst_19 : f32 to vector<1x1x32x128xf32>
    %39 = arith.mulf %38, %20 : vector<1x1x32x128xf32>
    %40 = math.exp %39 : vector<1x1x32x128xf32>
    %cst_20 = arith.constant 2.000000e+00 : f32
    %41 = vector.broadcast %cst_20 : f32 to vector<1x1x32x128xf32>
    %42 = arith.cmpf oge, %9, %41 : vector<1x1x32x128xf32>
    %cst_21 = arith.constant 0.000000e+00 : f32
    %43 = vector.broadcast %cst_21 : f32 to vector<1x1x32x128xf32>
    %44 = arith.select %42, %40, %43 : vector<1x1x32x128xi1>, vector<1x1x32x128xf32>
    %cst_22 = arith.constant 2.000000e+00 : f32
    %45 = vector.broadcast %cst_22 : f32 to vector<1x1x32x128xf32>
    %46 = arith.mulf %45, %44 : vector<1x1x32x128xf32>
    %47 = arith.addf %37, %46 : vector<1x1x32x128xf32>
    %cst_23 = arith.constant 9.000000e+00 : f32
    %48 = vector.broadcast %cst_23 : f32 to vector<1x1x32x128xf32>
    %49 = arith.mulf %48, %20 : vector<1x1x32x128xf32>
    %50 = math.exp %49 : vector<1x1x32x128xf32>
    %cst_24 = arith.constant 3.000000e+00 : f32
    %51 = vector.broadcast %cst_24 : f32 to vector<1x1x32x128xf32>
    %52 = arith.cmpf oge, %9, %51 : vector<1x1x32x128xf32>
    %cst_25 = arith.constant 0.000000e+00 : f32
    %53 = vector.broadcast %cst_25 : f32 to vector<1x1x32x128xf32>
    %54 = arith.select %52, %50, %53 : vector<1x1x32x128xi1>, vector<1x1x32x128xf32>
    %cst_26 = arith.constant 2.000000e+00 : f32
    %55 = vector.broadcast %cst_26 : f32 to vector<1x1x32x128xf32>
    %56 = arith.mulf %55, %54 : vector<1x1x32x128xf32>
    %57 = arith.addf %47, %56 : vector<1x1x32x128xf32>
    %cst_27 = arith.constant 1.600000e+01 : f32
    %58 = vector.broadcast %cst_27 : f32 to vector<1x1x32x128xf32>
    %59 = arith.mulf %58, %20 : vector<1x1x32x128xf32>
    %60 = math.exp %59 : vector<1x1x32x128xf32>
    %cst_28 = arith.constant 4.000000e+00 : f32
    %61 = vector.broadcast %cst_28 : f32 to vector<1x1x32x128xf32>
    %62 = arith.cmpf oge, %9, %61 : vector<1x1x32x128xf32>
    %cst_29 = arith.constant 0.000000e+00 : f32
    %63 = vector.broadcast %cst_29 : f32 to vector<1x1x32x128xf32>
    %64 = arith.select %62, %60, %63 : vector<1x1x32x128xi1>, vector<1x1x32x128xf32>
    %cst_30 = arith.constant 2.000000e+00 : f32
    %65 = vector.broadcast %cst_30 : f32 to vector<1x1x32x128xf32>
    %66 = arith.mulf %65, %64 : vector<1x1x32x128xf32>
    %67 = arith.addf %57, %66 : vector<1x1x32x128xf32>
    %68 = math.absf %67 : vector<1x1x32x128xf32>
    %cst_31 = arith.constant 9.99999993E-9 : f32
    %69 = vector.broadcast %cst_31 : f32 to vector<1x1x32x128xf32>
    %70 = arith.cmpf ogt, %68, %69 : vector<1x1x32x128xf32>
    %71 = tpu.reciprocal %67 {approx = true} : vector<1x1x32x128xf32> -> vector<1x1x32x128xf32>
    %72 = arith.mulf %67, %71 : vector<1x1x32x128xf32>
    %cst_32 = arith.constant 2.000000e+00 : f32
    %73 = vector.broadcast %cst_32 : f32 to vector<1x1x32x128xf32>
    %74 = arith.subf %73, %72 : vector<1x1x32x128xf32>
    %75 = arith.mulf %71, %74 : vector<1x1x32x128xf32>
    %76 = arith.mulf %67, %75 : vector<1x1x32x128xf32>
    %cst_33 = arith.constant 2.000000e+00 : f32
    %77 = vector.broadcast %cst_33 : f32 to vector<1x1x32x128xf32>
    %78 = arith.subf %77, %76 : vector<1x1x32x128xf32>
    %79 = arith.mulf %75, %78 : vector<1x1x32x128xf32>
    %cst_34 = arith.constant 0.000000e+00 : f32
    %80 = vector.broadcast %cst_34 : f32 to vector<1x1x32x128xf32>
    %81 = arith.select %70, %79, %80 : vector<1x1x32x128xi1>, vector<1x1x32x128xf32>
    %82 = arith.mulf %27, %81 : vector<1x1x32x128xf32>
    %83 = arith.mulf %34, %81 : vector<1x1x32x128xf32>
    %84 = arith.mulf %44, %81 : vector<1x1x32x128xf32>
    %85 = arith.mulf %54, %81 : vector<1x1x32x128xf32>
    %86 = arith.mulf %64, %81 : vector<1x1x32x128xf32>
    %87 = vector.extract_strided_slice %0 {offsets = [0, 0, 0, 0], sizes = [1, 2, 32, 1], strides = [1, 1, 1, 1]} : vector<1x2x32x128xf32> to vector<1x2x32x1xf32>
    %88 = vector.extract_strided_slice %0 {offsets = [0, 0, 0, 127], sizes = [1, 2, 32, 1], strides = [1, 1, 1, 1]} : vector<1x2x32x128xf32> to vector<1x2x32x1xf32>
    %89 = tpu.iota {dimensions = array<i32: 3>} : vector<1x1x1x128xi32>
    %90 = vector.shape_cast %0 : vector<1x2x32x128xf32> to vector<64x128xf32>
    %91 = vector.broadcast %82 : vector<1x1x32x128xf32> to vector<1x2x32x128xf32>
    %92 = arith.mulf %0, %91 : vector<1x2x32x128xf32>
    %c127_i32 = arith.constant 127 : i32
    %93 = tpu.dynamic_rotate %90 by %c127_i32 dim 1 : vector<64x128xf32>, i32 -> vector<64x128xf32>
    %94 = vector.shape_cast %93 : vector<64x128xf32> to vector<1x2x32x128xf32>
    %c127_i32_35 = arith.constant 127 : i32
    %95 = vector.broadcast %c127_i32_35 : i32 to vector<1x1x1x128xi32>
    %96 = arith.cmpi sge, %89, %95 : vector<1x1x1x128xi32>
    %97 = vector.shape_cast %96 : vector<1x1x1x128xi1> to vector<1x1x1x128xi1>
    %98 = vector.broadcast %97 : vector<1x1x1x128xi1> to vector<1x2x32x128xi1>
    %99 = vector.shape_cast %88 : vector<1x2x32x1xf32> to vector<1x2x32x1xf32>
    %100 = vector.broadcast %99 : vector<1x2x32x1xf32> to vector<1x2x32x128xf32>
    %101 = arith.select %98, %100, %94 : vector<1x2x32x128xi1>, vector<1x2x32x128xf32>
    %c1_i32 = arith.constant 1 : i32
    %102 = tpu.dynamic_rotate %90 by %c1_i32 dim 1 : vector<64x128xf32>, i32 -> vector<64x128xf32>
    %103 = vector.shape_cast %102 : vector<64x128xf32> to vector<1x2x32x128xf32>
    %c1_i32_36 = arith.constant 1 : i32
    %104 = vector.broadcast %c1_i32_36 : i32 to vector<1x1x1x128xi32>
    %105 = arith.cmpi slt, %89, %104 : vector<1x1x1x128xi32>
    %106 = vector.shape_cast %105 : vector<1x1x1x128xi1> to vector<1x1x1x128xi1>
    %107 = vector.broadcast %106 : vector<1x1x1x128xi1> to vector<1x2x32x128xi1>
    %108 = vector.shape_cast %87 : vector<1x2x32x1xf32> to vector<1x2x32x1xf32>
    %109 = vector.broadcast %108 : vector<1x2x32x1xf32> to vector<1x2x32x128xf32>
    %110 = arith.select %107, %109, %103 : vector<1x2x32x128xi1>, vector<1x2x32x128xf32>
    %111 = arith.addf %101, %110 : vector<1x2x32x128xf32>
    %112 = vector.broadcast %83 : vector<1x1x32x128xf32> to vector<1x2x32x128xf32>
    %113 = arith.mulf %111, %112 : vector<1x2x32x128xf32>
    %114 = arith.addf %92, %113 : vector<1x2x32x128xf32>
    %c126_i32 = arith.constant 126 : i32
    %115 = tpu.dynamic_rotate %90 by %c126_i32 dim 1 : vector<64x128xf32>, i32 -> vector<64x128xf32>
    %116 = vector.shape_cast %115 : vector<64x128xf32> to vector<1x2x32x128xf32>
    %c126_i32_37 = arith.constant 126 : i32
    %117 = vector.broadcast %c126_i32_37 : i32 to vector<1x1x1x128xi32>
    %118 = arith.cmpi sge, %89, %117 : vector<1x1x1x128xi32>
    %119 = vector.shape_cast %118 : vector<1x1x1x128xi1> to vector<1x1x1x128xi1>
    %120 = vector.broadcast %119 : vector<1x1x1x128xi1> to vector<1x2x32x128xi1>
    %121 = vector.shape_cast %88 : vector<1x2x32x1xf32> to vector<1x2x32x1xf32>
    %122 = vector.broadcast %121 : vector<1x2x32x1xf32> to vector<1x2x32x128xf32>
    %123 = arith.select %120, %122, %116 : vector<1x2x32x128xi1>, vector<1x2x32x128xf32>
    %c2_i32 = arith.constant 2 : i32
    %124 = tpu.dynamic_rotate %90 by %c2_i32 dim 1 : vector<64x128xf32>, i32 -> vector<64x128xf32>
    %125 = vector.shape_cast %124 : vector<64x128xf32> to vector<1x2x32x128xf32>
    %c2_i32_38 = arith.constant 2 : i32
    %126 = vector.broadcast %c2_i32_38 : i32 to vector<1x1x1x128xi32>
    %127 = arith.cmpi slt, %89, %126 : vector<1x1x1x128xi32>
    %128 = vector.shape_cast %127 : vector<1x1x1x128xi1> to vector<1x1x1x128xi1>
    %129 = vector.broadcast %128 : vector<1x1x1x128xi1> to vector<1x2x32x128xi1>
    %130 = vector.shape_cast %87 : vector<1x2x32x1xf32> to vector<1x2x32x1xf32>
    %131 = vector.broadcast %130 : vector<1x2x32x1xf32> to vector<1x2x32x128xf32>
    %132 = arith.select %129, %131, %125 : vector<1x2x32x128xi1>, vector<1x2x32x128xf32>
    %133 = arith.addf %123, %132 : vector<1x2x32x128xf32>
    %134 = vector.broadcast %84 : vector<1x1x32x128xf32> to vector<1x2x32x128xf32>
    %135 = arith.mulf %133, %134 : vector<1x2x32x128xf32>
    %136 = arith.addf %114, %135 : vector<1x2x32x128xf32>
    %c125_i32 = arith.constant 125 : i32
    %137 = tpu.dynamic_rotate %90 by %c125_i32 dim 1 : vector<64x128xf32>, i32 -> vector<64x128xf32>
    %138 = vector.shape_cast %137 : vector<64x128xf32> to vector<1x2x32x128xf32>
    %c125_i32_39 = arith.constant 125 : i32
    %139 = vector.broadcast %c125_i32_39 : i32 to vector<1x1x1x128xi32>
    %140 = arith.cmpi sge, %89, %139 : vector<1x1x1x128xi32>
    %141 = vector.shape_cast %140 : vector<1x1x1x128xi1> to vector<1x1x1x128xi1>
    %142 = vector.broadcast %141 : vector<1x1x1x128xi1> to vector<1x2x32x128xi1>
    %143 = vector.shape_cast %88 : vector<1x2x32x1xf32> to vector<1x2x32x1xf32>
    %144 = vector.broadcast %143 : vector<1x2x32x1xf32> to vector<1x2x32x128xf32>
    %145 = arith.select %142, %144, %138 : vector<1x2x32x128xi1>, vector<1x2x32x128xf32>
    %c3_i32 = arith.constant 3 : i32
    %146 = tpu.dynamic_rotate %90 by %c3_i32 dim 1 : vector<64x128xf32>, i32 -> vector<64x128xf32>
    %147 = vector.shape_cast %146 : vector<64x128xf32> to vector<1x2x32x128xf32>
    %c3_i32_40 = arith.constant 3 : i32
    %148 = vector.broadcast %c3_i32_40 : i32 to vector<1x1x1x128xi32>
    %149 = arith.cmpi slt, %89, %148 : vector<1x1x1x128xi32>
    %150 = vector.shape_cast %149 : vector<1x1x1x128xi1> to vector<1x1x1x128xi1>
    %151 = vector.broadcast %150 : vector<1x1x1x128xi1> to vector<1x2x32x128xi1>
    %152 = vector.shape_cast %87 : vector<1x2x32x1xf32> to vector<1x2x32x1xf32>
    %153 = vector.broadcast %152 : vector<1x2x32x1xf32> to vector<1x2x32x128xf32>
    %154 = arith.select %151, %153, %147 : vector<1x2x32x128xi1>, vector<1x2x32x128xf32>
    %155 = arith.addf %145, %154 : vector<1x2x32x128xf32>
    %156 = vector.broadcast %85 : vector<1x1x32x128xf32> to vector<1x2x32x128xf32>
    %157 = arith.mulf %155, %156 : vector<1x2x32x128xf32>
    %158 = arith.addf %136, %157 : vector<1x2x32x128xf32>
    %c124_i32 = arith.constant 124 : i32
    %159 = tpu.dynamic_rotate %90 by %c124_i32 dim 1 : vector<64x128xf32>, i32 -> vector<64x128xf32>
    %160 = vector.shape_cast %159 : vector<64x128xf32> to vector<1x2x32x128xf32>
    %c124_i32_41 = arith.constant 124 : i32
    %161 = vector.broadcast %c124_i32_41 : i32 to vector<1x1x1x128xi32>
    %162 = arith.cmpi sge, %89, %161 : vector<1x1x1x128xi32>
    %163 = vector.shape_cast %162 : vector<1x1x1x128xi1> to vector<1x1x1x128xi1>
    %164 = vector.broadcast %163 : vector<1x1x1x128xi1> to vector<1x2x32x128xi1>
    %165 = vector.shape_cast %88 : vector<1x2x32x1xf32> to vector<1x2x32x1xf32>
    %166 = vector.broadcast %165 : vector<1x2x32x1xf32> to vector<1x2x32x128xf32>
    %167 = arith.select %164, %166, %160 : vector<1x2x32x128xi1>, vector<1x2x32x128xf32>
    %c4_i32 = arith.constant 4 : i32
    %168 = tpu.dynamic_rotate %90 by %c4_i32 dim 1 : vector<64x128xf32>, i32 -> vector<64x128xf32>
    %169 = vector.shape_cast %168 : vector<64x128xf32> to vector<1x2x32x128xf32>
    %c4_i32_42 = arith.constant 4 : i32
    %170 = vector.broadcast %c4_i32_42 : i32 to vector<1x1x1x128xi32>
    %171 = arith.cmpi slt, %89, %170 : vector<1x1x1x128xi32>
    %172 = vector.shape_cast %171 : vector<1x1x1x128xi1> to vector<1x1x1x128xi1>
    %173 = vector.broadcast %172 : vector<1x1x1x128xi1> to vector<1x2x32x128xi1>
    %174 = vector.shape_cast %87 : vector<1x2x32x1xf32> to vector<1x2x32x1xf32>
    %175 = vector.broadcast %174 : vector<1x2x32x1xf32> to vector<1x2x32x128xf32>
    %176 = arith.select %173, %175, %169 : vector<1x2x32x128xi1>, vector<1x2x32x128xf32>
    %177 = arith.addf %167, %176 : vector<1x2x32x128xf32>
    %178 = vector.broadcast %86 : vector<1x1x32x128xf32> to vector<1x2x32x128xf32>
    %179 = arith.mulf %177, %178 : vector<1x2x32x128xf32>
    %180 = arith.addf %158, %179 : vector<1x2x32x128xf32>
    %c0_43 = arith.constant 0 : index
    %c0_44 = arith.constant 0 : index
    %c0_45 = arith.constant 0 : index
    %c0_46 = arith.constant 0 : index
    %181 = vector.load %arg4[%c0_43, %c0_44, %c0_45, %c0_46] : memref<1x2x32x128xf32, #tpu.memory_space<vmem>>, vector<1x2x32x128xf32>
    tpu.vector_store %arg4[%c0_43, %c0_44, %c0_45, %c0_46], %180 {strides = array<i32>} : memref<1x2x32x128xf32, #tpu.memory_space<vmem>>, vector<1x2x32x128xf32>,
    return
  }
  func.func @transform_0(%arg0: i32, %arg1: i32) -> (i32, i32, i32, i32) {
    %c0_i32 = arith.constant 0 : i32
    %c0_i32_0 = arith.constant 0 : i32
    %c0_i32_1 = arith.constant 0 : i32
    return %arg0, %arg1, %c0_i32, %c0_i32_0 : i32, i32, i32, i32
  }
  func.func @transform_1(%arg0: i32, %arg1: i32) -> (i32, i32, i32, i32) {
    %c0_i32 = arith.constant 0 : i32
    %c0_i32_0 = arith.constant 0 : i32
    %c0_i32_1 = arith.constant 0 : i32
    %c0_i32_2 = arith.constant 0 : i32
    return %arg0, %c0_i32, %c0_i32_0, %c0_i32_1 : i32, i32, i32, i32
  }
  func.func @transform_2(%arg0: i32, %arg1: i32) -> (i32, i32, i32, i32) {
    %c0_i32 = arith.constant 0 : i32
    %c0_i32_0 = arith.constant 0 : i32
    %c0_i32_1 = arith.constant 0 : i32
    return %arg0, %arg1, %c0_i32, %c0_i32_0 : i32, i32, i32, i32
  }
}

</mosaic_0001>

<llo_original>
// kernel: tpu_custom_call.1
$region0: #{tpu_custom_call.1}
  #allocation0 [shape = 'u32[]', space=smem, size = 0x4, offset = 0x4, fixed_abs, tag = 'smem constant byte address 0x4 - core index']
  #allocation1 [shape = 'u32[144,128]{1,0:T(1,128)}', space=vmem, size = 0x12000, scoped, tag = 'internal scratch']
  %s0 = inlined_call_operand.hbm [shape: f32[2,4,32,128], index: 0, kind: input, shape index: {}]
  %s1 = inlined_call_operand.hbm [shape: f32[2,1,32,128], index: 1, kind: input, shape index: {}]
  %s2 = inlined_call_operand.hbm [shape: f32[2,4,32,128], index: 2, kind: output, shape index: {}]
  %s3 = sld [smem:[#allocation0]]
  $region49: #{tpu_custom_call.1} parent=0
    _
  %s5 = ssub.s32 1, %s3
  %s6 = scalar_select 0, %s5, %s3
  $region1: #{tpu_custom_call.1} parent=0
    #allocation2 [shape = 'u8[65536]{0}', space=vmem, size = 0x10000, scoped, tag = 'input window, operand 0']
    #allocation3 [shape = 's32[2]{0}', space=sflag, size = 0x8, scoped, tag = 'scoped memory for tpu_custom_call.1']
    #allocation4 [shape = 's32[2]{0}', space=sflag, size = 0x8, scoped, tag = 'scoped memory for tpu_custom_call.1']
    #allocation5 [shape = 'u8[32768]{0}', space=vmem, size = 0x8000, scoped, tag = 'input window, operand 1']
    #allocation6 [shape = 's32[2]{0}', space=sflag, size = 0x8, scoped, tag = 'scoped memory for tpu_custom_call.1']
    #allocation7 [shape = 'u8[65536]{0}', space=vmem, size = 0x10000, scoped, tag = 'output window, operand 0']
    %7 = vsyncpa [#allocation3], 0
    %s8 = scalar_lea.sflag [#allocation3], 1
    %9 = vsyncpa %s8, 0
    %10 = vsyncpa [#allocation6], 0
    %s11 = scalar_lea.sflag [#allocation6], 1
    %12 = vsyncpa %s11, 0
    %13 = vsyncpa [#allocation4], 0
    %s14 = scalar_lea.sflag [#allocation4], 1
    %15 = vsyncpa %s14, 0
    loop: start=0, step=1, limit=6
    $region2: #{tpu_custom_call.1} parent=1 // loop_pre_header
      _
    $region3: #{tpu_custom_call.1} parent=1 // loop_header
      %s17 = sphi 0, %s21
      %p18 = scmp.ge.s32.totalorder %s17, 6
      %s24 = sphi 0, %s36
      %s25 = sphi 0, %s32
      %s26 = sphi 0, %s24
      %s27 = sphi 0, %s25
      %s28 = sphi 0, %s26
      %s29 = sphi 0, %s27
      %s41 = sphi 0, %s43
      %s44 = sphi 0, %s41
      %s45 = sphi 0, %s44
      %s61 = sphi 0, %s45
      %s67 = sphi 0, %s69
      %s70 = sphi 0, %s67
      %s71 = sphi 0, %s70
      %s87 = sphi 0, %s71
      %s95 = sphi 0, %s97
      %s98 = sphi 0, %s95
      %s99 = sphi 0, %s98
      %s115 = sphi 0, %s99
    $region4: #{tpu_custom_call.1} parent=1 // loop_header_branch
      %20 = sbr.rel (%p18) target = $region8
    $region5: #{tpu_custom_call.1} parent=1 // loop_body
      %s22 = ssub.s32 %s17, 1
      %s23 = ssub.s32 %s17, 2
      %s30 = sadd.s32 1, %s25
      %p31 = scmp.ge.s32.totalorder %s30, 2
      %s32 = scalar_select %p31, 0, %s30
      %s33 = sadd.s32 1, %s24
      %s34 = scalar_select %p31, %s33, %s24
      %p35 = scmp.ge.s32.totalorder %s34, 2
      %s36 = scalar_select %p35, 0, %s34
      %s37 = ssub.s32 %s24, %s36
      %s38 = ssub.s32 %s25, %s32
      %s39 = sor.u32 %s37, %s38
      %p40 = scmp.eq.s32.totalorder %s39, 0
      %s42 = sadd.s32 %s41, 1
      %s43 = scalar_select %p40, %s41, %s42
      %p46 = pneg %p40
      %p47 = scmp.eq.s32.totalorder %s17, 3
      %p48 = por %p46, %p47
      %p49 = scmp.ne.s32.totalorder %s41, %s44
      %p50 = scmp.eq.s32.totalorder %s17, 0
      %p51 = por %p49, %p50
      %p52 = scmp.ne.s32.totalorder %s41, %s44
      %p53 = scmp.eq.s32.totalorder %s22, 3
      %p54 = por %p52, %p53
      %p55 = scmp.ne.s32.totalorder %s44, %s45
      %p56 = scmp.eq.s32.totalorder %s22, 0
      %p57 = por %p55, %p56
      %p58 = scmp.ne.s32.totalorder %s44, %s45
      %p59 = scmp.eq.s32.totalorder %s23, 3
      %p60 = por %p58, %p59
      %p62 = scmp.ne.s32.totalorder %s45, %s61
      %p63 = scmp.eq.s32.totalorder %s23, 0
      %p64 = por %p62, %p63
      %s65 = ssub.s32 %s24, %s36
      %p66 = scmp.eq.s32.totalorder %s65, 0
      %s68 = sadd.s32 %s67, 1
      %s69 = scalar_select %p66, %s67, %s68
      %p72 = pneg %p66
      %p73 = scmp.eq.s32.totalorder %s17, 3
      %p74 = por %p72, %p73
      %p75 = scmp.ne.s32.totalorder %s67, %s70
      %p76 = scmp.eq.s32.totalorder %s17, 0
      %p77 = por %p75, %p76
      %p78 = scmp.ne.s32.totalorder %s67, %s70
      %p79 = scmp.eq.s32.totalorder %s22, 3
      %p80 = por %p78, %p79
      %p81 = scmp.ne.s32.totalorder %s70, %s71
      %p82 = scmp.eq.s32.totalorder %s22, 0
      %p83 = por %p81, %p82
      %p84 = scmp.ne.s32.totalorder %s70, %s71
      %p85 = scmp.eq.s32.totalorder %s23, 3
      %p86 = por %p84, %p85
      %p88 = scmp.ne.s32.totalorder %s71, %s87
      %p89 = scmp.eq.s32.totalorder %s23, 0
      %p90 = por %p88, %p89
      %s91 = ssub.s32 %s24, %s36
      %s92 = ssub.s32 %s25, %s32
      %s93 = sor.u32 %s91, %s92
      %p94 = scmp.eq.s32.totalorder %s93, 0
      %s96 = sadd.s32 %s95, 1
      %s97 = scalar_select %p94, %s95, %s96
      %p100 = pneg %p94
      %p101 = scmp.eq.s32.totalorder %s17, 3
      %p102 = por %p100, %p101
      %p103 = scmp.ne.s32.totalorder %s95, %s98
      %p104 = scmp.eq.s32.totalorder %s17, 0
      %p105 = por %p103, %p104
      %p106 = scmp.ne.s32.totalorder %s95, %s98
      %p107 = scmp.eq.s32.totalorder %s22, 3
      %p108 = por %p106, %p107
      %p109 = scmp.ne.s32.totalorder %s98, %s99
      %p110 = scmp.eq.s32.totalorder %s22, 0
      %p111 = por %p109, %p110
      %p112 = scmp.ne.s32.totalorder %s98, %s99
      %p113 = scmp.eq.s32.totalorder %s23, 3
      %p114 = por %p112, %p113
      %p116 = scmp.ne.s32.totalorder %s99, %s115
      %p117 = scmp.eq.s32.totalorder %s23, 0
      %p118 = por %p116, %p117
      %p119 = scmp.le.s32.totalorder 1, %s17
      %p120 = scmp.lt.s32.totalorder %s17, 5
      %p121 = pnand %p119, %p120
      %p122 = pneg %p121
      // Predicated region
      $region9: #{tpu_custom_call.1} parent=5 // pred_check
        _
      $region10: #{tpu_custom_call.1} parent=5 // pred_check_branch
        %124 = sbr.rel (%p121) target = $region12
      $region11: #{tpu_custom_call.1} parent=5 // pred_region
        %s125 = ssub.s32 %s17, 1
      $region12: #{tpu_custom_call.1} parent=5 // pred_fallthru
        _
      %p126 = scmp.lt.s32.totalorder %s17, 4
      // Predicated region
      $region13: #{tpu_custom_call.1} parent=5 // pred_check
        %p127 = pneg %p126
      $region14: #{tpu_custom_call.1} parent=5 // pred_check_branch
        %129 = sbr.rel (%p127) target = $region16
      $region15: #{tpu_custom_call.1} parent=5 // pred_region
        // Predicated region
        $region17: #{tpu_custom_call.1} parent=15 // pred_check
          %p130 = pneg %p51
        $region18: #{tpu_custom_call.1} parent=15 // pred_check_branch
          %132 = sbr.rel (%p130) target = $region20
        $region19: #{tpu_custom_call.1} parent=15 // pred_region
          %s133 = sand.u32 %s41, 1
          %s134 = scalar_lea.sflag [#allocation3], %s133
          %s135 = sand.u32 %s41, 1
          %s136 = smul.addr %s135, 64
          %s137 = scalar_lea.vmem [#allocation2], %s136
          %s138 = smul.u32 2, %s25
          %s140 = ssub.s32 1024, 1024
          %141 = vsyncadd %s134, %s140
          %s142 = smul.addr %s138, 4
          %s143 = smul.addr %s24, 16
          %s144 = sadd.s32 %s142, %s143
          %s145 = smul.addr %s144, 128
          %s146 = scalar_lea.hbm %s0, %s145
          %s147 = sshll.u32 %s137, 4
          %s148 = int_to_ptr.vmem [resolvable:$true] %s147
          %153 = dma.hbm_to_vmem [thread:$0]  %s146, 1024, %s148, %s134, 128, 128, 8
        $region20: #{tpu_custom_call.1} parent=15 // pred_fallthru
          _
        // Predicated region
        $region21: #{tpu_custom_call.1} parent=15 // pred_check
          %p154 = pneg %p77
        $region22: #{tpu_custom_call.1} parent=15 // pred_check_branch
          %156 = sbr.rel (%p154) target = $region24
        $region23: #{tpu_custom_call.1} parent=15 // pred_region
          %s157 = sand.u32 %s67, 1
          %s158 = scalar_lea.sflag [#allocation6], %s157
          %s159 = sand.u32 %s67, 1
          %s160 = smul.addr %s159, 32
          %s161 = scalar_lea.vmem [#allocation5], %s160
          %s163 = ssub.s32 512, 512
          %164 = vsyncadd %s158, %s163
          %s165 = smul.addr %s24, 4
          %s166 = smul.addr %s165, 128
          %s167 = scalar_lea.hbm %s1, %s166
          %s168 = sshll.u32 %s161, 4
          %s169 = int_to_ptr.vmem [resolvable:$true] %s168
          %174 = dma.hbm_to_vmem [thread:$0]  %s167, 512, %s169, %s158, 128, 128, 8
        $region24: #{tpu_custom_call.1} parent=15 // pred_fallthru
          _
      $region16: #{tpu_custom_call.1} parent=5 // pred_fallthru
        _
      %p175 = scmp.le.s32.totalorder 1, %s17
      %p176 = scmp.lt.s32.totalorder %s17, 5
      %p177 = pnand %p175, %p176
      %p178 = pneg %p177
      // Predicated region
      $region25: #{tpu_custom_call.1} parent=5 // pred_check
        _
      $region26: #{tpu_custom_call.1} parent=5 // pred_check_branch
        %180 = sbr.rel (%p177) target = $region28
      $region27: #{tpu_custom_call.1} parent=5 // pred_region
        %s181 = ssub.s32 %s17, 1
        %s182 = sand.u32 %s44, 1
        %s183 = scalar_lea.sflag [#allocation3], %s182
        %s184 = sand.u32 %s44, 1
        %s185 = smul.addr %s184, 64
        %s186 = scalar_lea.vmem [#allocation2], %s185
        // Predicated region
        $region29: #{tpu_custom_call.1} parent=27 // pred_check
          %p187 = pneg %p57
        $region30: #{tpu_custom_call.1} parent=27 // pred_check_branch
          %189 = sbr.rel (%p187) target = $region32
        $region31: #{tpu_custom_call.1} parent=27 // pred_region
          %190 = dma.done %s183, 1024
        $region32: #{tpu_custom_call.1} parent=27 // pred_fallthru
          _
        %s191 = sand.u32 %s70, 1
        %s192 = scalar_lea.sflag [#allocation6], %s191
        %s193 = sand.u32 %s70, 1
        %s194 = smul.addr %s193, 32
        %s195 = scalar_lea.vmem [#allocation5], %s194
        // Predicated region
        $region33: #{tpu_custom_call.1} parent=27 // pred_check
          %p196 = pneg %p83
        $region34: #{tpu_custom_call.1} parent=27 // pred_check_branch
          %198 = sbr.rel (%p196) target = $region36
        $region35: #{tpu_custom_call.1} parent=27 // pred_region
          %199 = dma.done %s192, 512
        $region36: #{tpu_custom_call.1} parent=27 // pred_fallthru
          _
        %s200 = sand.u32 %s44, 1
        %s201 = scalar_lea.sflag [#allocation3], %s200
        %s202 = sand.u32 %s44, 1
        %s203 = smul.addr %s202, 64
        %s204 = scalar_lea.vmem [#allocation2], %s203
        %p205 = pneg %p57
        %p206 = pneg %p54
        %s207 = sand.u32 %s70, 1
        %s208 = scalar_lea.sflag [#allocation6], %s207
        %s209 = sand.u32 %s70, 1
        %s210 = smul.addr %s209, 32
        %s211 = scalar_lea.vmem [#allocation5], %s210
        %p212 = pneg %p83
        %p213 = pneg %p80
        %p214 = pneg %p111
        %p215 = pneg %p108
        %s216 = sand.u32 %s98, 1
        %s217 = scalar_lea.sflag [#allocation4], %s216
        %s218 = sand.u32 %s98, 1
        %s219 = smul.addr %s218, 64
        %s220 = scalar_lea.vmem [#allocation7], %s219
        %s221 = smul.u32 2, %s27
        %s222 = smul.u32 2, %s27
        %v223 = vld [vmem:[%s186] sm:$0xff]
        %v224 = vld [vmem:[%s186 + $0x8] sm:$0xff]
        %v225 = vld [vmem:[%s186 + $0x10] sm:$0xff]
        %v226 = vld [vmem:[%s186 + $0x18] sm:$0xff]
        %v227 = vld [vmem:[%s186 + $0x20] sm:$0xff]
        %v228 = vld [vmem:[%s186 + $0x28] sm:$0xff]
        %v229 = vld [vmem:[%s186 + $0x30] sm:$0xff]
        %v230 = vld [vmem:[%s186 + $0x38] sm:$0xff]
        %v231 = vld [vmem:[%s195] sm:$0xff]
        %v232 = vld [vmem:[%s195 + $0x8] sm:$0xff]
        %v233 = vld [vmem:[%s195 + $0x10] sm:$0xff]
        %v234 = vld [vmem:[%s195 + $0x18] sm:$0xff]
        %v235 = vmul.f32 %v231, 2.0
        %v236 = vmul.f32 %v232, 2.0
        %v237 = vmul.f32 %v233, 2.0
        %v238 = vmul.f32 %v234, 2.0
        %v239 = vmul.f32 %v235, %v231
        %v240 = vmul.f32 %v236, %v232
        %v241 = vmul.f32 %v237, %v233
        %v242 = vmul.f32 %v238, %v234
        %v243 = vceil.f32 %v235
        %v244 = vceil.f32 %v236
        %v245 = vceil.f32 %v237
        %v246 = vceil.f32 %v238
        %v247 = vrcp.pop %v239
        %v248 = vrcp.pop %v240
        %v249 = vrcp.pop %v241
        %v250 = vrcp.pop %v242
        %v251 = vmul.f32 %v239, %v247
        %v252 = vmul.f32 %v240, %v248
        %v253 = vmul.f32 %v241, %v249
        %v254 = vmul.f32 %v242, %v250
        %v255 = vsub.f32 2.0, %v251
        %v256 = vsub.f32 2.0, %v252
        %v257 = vsub.f32 2.0, %v253
        %v258 = vsub.f32 2.0, %v254
        %v259 = vmul.f32 %v247, %v255
        %v260 = vmul.f32 %v248, %v256
        %v261 = vmul.f32 %v249, %v257
        %v262 = vmul.f32 %v250, %v258
        %v263 = vmul.f32 %v239, %v259
        %v264 = vmul.f32 %v240, %v260
        %v265 = vmul.f32 %v241, %v261
        %v266 = vmul.f32 %v242, %v262
        %v267 = vsub.f32 2.0, %v263
        %v268 = vsub.f32 2.0, %v264
        %v269 = vsub.f32 2.0, %v265
        %v270 = vsub.f32 2.0, %v266
        %v271 = vmul.f32 %v259, %v267
        %v272 = vmul.f32 %v260, %v268
        %v273 = vmul.f32 %v261, %v269
        %v274 = vmul.f32 %v262, %v270
        %v275 = vsub.f32 0.0, %v271
        %v276 = vsub.f32 0.0, %v272
        %v277 = vsub.f32 0.0, %v273
        %v278 = vsub.f32 0.0, %v274
        %v279 = vmul.f32 %v275, 0.0
        %v280 = vmul.f32 %v276, 0.0
        %v281 = vmul.f32 %v277, 0.0
        %v282 = vmul.f32 %v278, 0.0
        %v283 = vmul.f32 %v279, 1.442695
        %v284 = vpow.pop %v283
        %v285 = vmul.f32 %v280, 1.442695
        %v286 = vpow.pop %v285
        %v287 = vmul.f32 %v281, 1.442695
        %v288 = vpow.pop %v287
        %v289 = vmul.f32 %v282, 1.442695
        %v290 = vpow.pop %v289
        %vm291 = vcmp.ge.f32.partialorder %v243, 0.0
        %vm292 = vcmp.ge.f32.partialorder %v244, 0.0
        %vm293 = vcmp.ge.f32.partialorder %v245, 0.0
        %vm294 = vcmp.ge.f32.partialorder %v246, 0.0
        %v295 = vsel %vm291, %v284, 0.0
        %v296 = vsel %vm292, %v286, 0.0
        %v297 = vsel %vm293, %v288, 0.0
        %v298 = vsel %vm294, %v290, 0.0
        %v299 = vmul.f32 %v275, 1.442695
        %v300 = vpow.pop %v299
        %v301 = vmul.f32 %v276, 1.442695
        %v302 = vpow.pop %v301
        %v303 = vmul.f32 %v277, 1.442695
        %v304 = vpow.pop %v303
        %v305 = vmul.f32 %v278, 1.442695
        %v306 = vpow.pop %v305
        %vm307 = vcmp.ge.f32.partialorder %v243, 1.0
        %vm308 = vcmp.ge.f32.partialorder %v244, 1.0
        %vm309 = vcmp.ge.f32.partialorder %v245, 1.0
        %vm310 = vcmp.ge.f32.partialorder %v246, 1.0
        %v311 = vsel %vm307, %v300, 0.0
        %v312 = vsel %vm308, %v302, 0.0
        %v313 = vsel %vm309, %v304, 0.0
        %v314 = vsel %vm310, %v306, 0.0
        %v315 = vmul.f32 %v311, 2.0
        %v316 = vmul.f32 %v312, 2.0
        %v317 = vmul.f32 %v313, 2.0
        %v318 = vmul.f32 %v314, 2.0
        %v319 = vadd.f32 %v295, %v315
        %v320 = vadd.f32 %v296, %v316
        %v321 = vadd.f32 %v297, %v317
        %v322 = vadd.f32 %v298, %v318
        %v323 = vmul.f32 %v275, 4.0
        %v324 = vmul.f32 %v276, 4.0
        %v325 = vmul.f32 %v277, 4.0
        %v326 = vmul.f32 %v278, 4.0
        %v327 = vmul.f32 %v323, 1.442695
        %v328 = vpow.pop %v327
        %v329 = vmul.f32 %v324, 1.442695
        %v330 = vpow.pop %v329
        %v331 = vmul.f32 %v325, 1.442695
        %v332 = vpow.pop %v331
        %v333 = vmul.f32 %v326, 1.442695
        %v334 = vpow.pop %v333
        %vm335 = vcmp.ge.f32.partialorder %v243, 2.0
        %vm336 = vcmp.ge.f32.partialorder %v244, 2.0
        %vm337 = vcmp.ge.f32.partialorder %v245, 2.0
        %vm338 = vcmp.ge.f32.partialorder %v246, 2.0
        %v339 = vsel %vm335, %v328, 0.0
        %v340 = vsel %vm336, %v330, 0.0
        %v341 = vsel %vm337, %v332, 0.0
        %v342 = vsel %vm338, %v334, 0.0
        %v343 = vmul.f32 %v339, 2.0
        %v344 = vmul.f32 %v340, 2.0
        %v345 = vmul.f32 %v341, 2.0
        %v346 = vmul.f32 %v342, 2.0
        %v347 = vadd.f32 %v319, %v343
        %v348 = vadd.f32 %v320, %v344
        %v349 = vadd.f32 %v321, %v345
        %v350 = vadd.f32 %v322, %v346
        %v351 = vmul.f32 %v275, 9.0
        %v352 = vmul.f32 %v276, 9.0
        %v353 = vmul.f32 %v277, 9.0
        %v354 = vmul.f32 %v278, 9.0
        %v355 = vmul.f32 %v351, 1.442695
        %v356 = vpow.pop %v355
        %v357 = vmul.f32 %v352, 1.442695
        %v358 = vpow.pop %v357
        %v359 = vmul.f32 %v353, 1.442695
        %v360 = vpow.pop %v359
        %v361 = vmul.f32 %v354, 1.442695
        %v362 = vpow.pop %v361
        %vm363 = vcmp.ge.f32.partialorder %v243, 3.0
        %vm364 = vcmp.ge.f32.partialorder %v244, 3.0
        %vm365 = vcmp.ge.f32.partialorder %v245, 3.0
        %vm366 = vcmp.ge.f32.partialorder %v246, 3.0
        %v367 = vsel %vm363, %v356, 0.0
        %v368 = vsel %vm364, %v358, 0.0
        %v369 = vsel %vm365, %v360, 0.0
        %v370 = vsel %vm366, %v362, 0.0
        %v371 = vmul.f32 %v367, 2.0
        %v372 = vmul.f32 %v368, 2.0
        %v373 = vmul.f32 %v369, 2.0
        %v374 = vmul.f32 %v370, 2.0
        %v375 = vadd.f32 %v347, %v371
        %v376 = vadd.f32 %v348, %v372
        %v377 = vadd.f32 %v349, %v373
        %v378 = vadd.f32 %v350, %v374
        %v379 = vmul.f32 %v275, 16.0
        %v380 = vmul.f32 %v276, 16.0
        %v381 = vmul.f32 %v277, 16.0
        %v382 = vmul.f32 %v278, 16.0
        %v383 = vmul.f32 %v379, 1.442695
        %v384 = vpow.pop %v383
        %v385 = vmul.f32 %v380, 1.442695
        %v386 = vpow.pop %v385
        %v387 = vmul.f32 %v381, 1.442695
        %v388 = vpow.pop %v387
        %v389 = vmul.f32 %v382, 1.442695
        %v390 = vpow.pop %v389
        %vm391 = vcmp.ge.f32.partialorder %v243, 4.0
        %vm392 = vcmp.ge.f32.partialorder %v244, 4.0
        %vm393 = vcmp.ge.f32.partialorder %v245, 4.0
        %vm394 = vcmp.ge.f32.partialorder %v246, 4.0
        %v395 = vsel %vm391, %v384, 0.0
        %v396 = vsel %vm392, %v386, 0.0
        %v397 = vsel %vm393, %v388, 0.0
        %v398 = vsel %vm394, %v390, 0.0
        %v399 = vmul.f32 %v395, 2.0
        %v400 = vmul.f32 %v396, 2.0
        %v401 = vmul.f32 %v397, 2.0
        %v402 = vmul.f32 %v398, 2.0
        %v403 = vadd.f32 %v375, %v399
        %v404 = vadd.f32 %v376, %v400
        %v405 = vadd.f32 %v377, %v401
        %v406 = vadd.f32 %v378, %v402
        %v407 = vand.u32 2147483647, %v403
        %v408 = vand.u32 2147483647, %v404
        %v409 = vand.u32 2147483647, %v405
        %v410 = vand.u32 2147483647, %v406
        %vm411 = vcmp.gt.f32.partialorder %v407, 1e-08
        %vm412 = vcmp.gt.f32.partialorder %v408, 1e-08
        %vm413 = vcmp.gt.f32.partialorder %v409, 1e-08
        %vm414 = vcmp.gt.f32.partialorder %v410, 1e-08
        %v415 = vrcp.pop %v403
        %v416 = vrcp.pop %v404
        %v417 = vrcp.pop %v405
        %v418 = vrcp.pop %v406
        %v419 = vmul.f32 %v403, %v415
        %v420 = vmul.f32 %v404, %v416
        %v421 = vmul.f32 %v405, %v417
        %v422 = vmul.f32 %v406, %v418
        %v423 = vsub.f32 2.0, %v419
        %v424 = vsub.f32 2.0, %v420
        %v425 = vsub.f32 2.0, %v421
        %v426 = vsub.f32 2.0, %v422
        %v427 = vmul.f32 %v415, %v423
        %v428 = vmul.f32 %v416, %v424
        %v429 = vmul.f32 %v417, %v425
        %v430 = vmul.f32 %v418, %v426
        %v431 = vmul.f32 %v403, %v427
        %v432 = vmul.f32 %v404, %v428
        %v433 = vmul.f32 %v405, %v429
        %v434 = vmul.f32 %v406, %v430
        %v435 = vsub.f32 2.0, %v431
        %v436 = vsub.f32 2.0, %v432
        %v437 = vsub.f32 2.0, %v433
        %v438 = vsub.f32 2.0, %v434
        %v439 = vmul.f32 %v427, %v435
        %v440 = vmul.f32 %v428, %v436
        %v441 = vmul.f32 %v429, %v437
        %v442 = vmul.f32 %v430, %v438
        %v443 = vsel %vm411, %v439, 0.0
        %v444 = vsel %vm412, %v440, 0.0
        %v445 = vsel %vm413, %v441, 0.0
        %v446 = vsel %vm414, %v442, 0.0
        %v447 = vmul.f32 %v295, %v443
        %v448 = vmul.f32 %v296, %v444
        %v449 = vmul.f32 %v297, %v445
        %v450 = vmul.f32 %v298, %v446
        %v451 = vmul.f32 %v311, %v443
        %v452 = vmul.f32 %v312, %v444
        %v453 = vmul.f32 %v313, %v445
        %v454 = vmul.f32 %v314, %v446
        %v455 = vmul.f32 %v339, %v443
        %v456 = vmul.f32 %v340, %v444
        %v457 = vmul.f32 %v341, %v445
        %v458 = vmul.f32 %v342, %v446
        %v459 = vmul.f32 %v367, %v443
        %v460 = vmul.f32 %v368, %v444
        %v461 = vmul.f32 %v369, %v445
        %v462 = vmul.f32 %v370, %v446
        %v463 = vmul.f32 %v395, %v443
        %v464 = vmul.f32 %v396, %v444
        %v465 = vmul.f32 %v397, %v445
        %v466 = vmul.f32 %v398, %v446
        %v467 = vlaneseq
        %v468 = vand.u32 %v467, 127
        %v469 = vmul.f32 %v223, %v447
        %v470 = vmul.f32 %v224, %v448
        %v471 = vmul.f32 %v225, %v449
        %v472 = vmul.f32 %v226, %v450
        %v473 = vmul.f32 %v227, %v447
        %v474 = vmul.f32 %v228, %v448
        %v475 = vmul.f32 %v229, %v449
        %v476 = vmul.f32 %v230, %v450
        %477 = vrot.lane.b32.xlu0 %v223, 127
        %v478 = vpop.permute.xlu0 %477
        %479 = vrot.lane.b32.xlu0 %v224, 127
        %v480 = vpop.permute.xlu0 %479
        %481 = vrot.lane.b32.xlu0 %v225, 127
        %v482 = vpop.permute.xlu0 %481
        %483 = vrot.lane.b32.xlu0 %v226, 127
        %v484 = vpop.permute.xlu0 %483
        %485 = vrot.lane.b32.xlu0 %v227, 127
        %v486 = vpop.permute.xlu0 %485
        %487 = vrot.lane.b32.xlu0 %v228, 127
        %v488 = vpop.permute.xlu0 %487
        %489 = vrot.lane.b32.xlu0 %v229, 127
        %v490 = vpop.permute.xlu0 %489
        %491 = vrot.lane.b32.xlu0 %v230, 127
        %v492 = vpop.permute.xlu0 %491
        %vm493 = vcmp.ge.s32.totalorder %v468, 127
        %v494 = vsel %vm493, 1, 0
        %vm495 = vcmp.eq.s32.totalorder %v494, 1
        %497 = vset.pattern.permute.xlu0 127
        %498 = vperm.xlu0 %497, %v223
        %v499 = vpop.permute.xlu0 %498
        %502 = vset.pattern.permute.xlu0 127
        %503 = vperm.xlu0 %502, %v224
        %v504 = vpop.permute.xlu0 %503
        %507 = vset.pattern.permute.xlu0 127
        %508 = vperm.xlu0 %507, %v225
        %v509 = vpop.permute.xlu0 %508
        %512 = vset.pattern.permute.xlu0 127
        %513 = vperm.xlu0 %512, %v226
        %v514 = vpop.permute.xlu0 %513
        %517 = vset.pattern.permute.xlu0 127
        %518 = vperm.xlu0 %517, %v227
        %v519 = vpop.permute.xlu0 %518
        %522 = vset.pattern.permute.xlu0 127
        %523 = vperm.xlu0 %522, %v228
        %v524 = vpop.permute.xlu0 %523
        %527 = vset.pattern.permute.xlu0 127
        %528 = vperm.xlu0 %527, %v229
        %v529 = vpop.permute.xlu0 %528
        %532 = vset.pattern.permute.xlu0 127
        %533 = vperm.xlu0 %532, %v230
        %v534 = vpop.permute.xlu0 %533
        %v536 = vsel %vm495, %v499, %v478
        %v537 = vsel %vm495, %v504, %v480
        %v538 = vsel %vm495, %v509, %v482
        %v539 = vsel %vm495, %v514, %v484
        %v540 = vsel %vm495, %v519, %v486
        %v541 = vsel %vm495, %v524, %v488
        %v542 = vsel %vm495, %v529, %v490
        %v543 = vsel %vm495, %v534, %v492
        %544 = vrot.lane.b32.xlu0 %v223, 1
        %v545 = vpop.permute.xlu0 %544
        %546 = vrot.lane.b32.xlu0 %v224, 1
        %v547 = vpop.permute.xlu0 %546
        %548 = vrot.lane.b32.xlu0 %v225, 1
        %v549 = vpop.permute.xlu0 %548
        %550 = vrot.lane.b32.xlu0 %v226, 1
        %v551 = vpop.permute.xlu0 %550
        %552 = vrot.lane.b32.xlu0 %v227, 1
        %v553 = vpop.permute.xlu0 %552
        %554 = vrot.lane.b32.xlu0 %v228, 1
        %v555 = vpop.permute.xlu0 %554
        %556 = vrot.lane.b32.xlu0 %v229, 1
        %v557 = vpop.permute.xlu0 %556
        %558 = vrot.lane.b32.xlu0 %v230, 1
        %v559 = vpop.permute.xlu0 %558
        %vm560 = vcmp.lt.s32.totalorder %v468, 1
        %v561 = vsel %vm560, 1, 0
        %vm562 = vcmp.eq.s32.totalorder %v561, 1
        %563 = vset.pattern.permute.xlu0 0
        %564 = vperm.xlu0 %563, %v223
        %v565 = vpop.permute.xlu0 %564
        %567 = vset.pattern.permute.xlu0 0
        %568 = vperm.xlu0 %567, %v224
        %v569 = vpop.permute.xlu0 %568
        %571 = vset.pattern.permute.xlu0 0
        %572 = vperm.xlu0 %571, %v225
        %v573 = vpop.permute.xlu0 %572
        %575 = vset.pattern.permute.xlu0 0
        %576 = vperm.xlu0 %575, %v226
        %v577 = vpop.permute.xlu0 %576
        %579 = vset.pattern.permute.xlu0 0
        %580 = vperm.xlu0 %579, %v227
        %v581 = vpop.permute.xlu0 %580
        %583 = vset.pattern.permute.xlu0 0
        %584 = vperm.xlu0 %583, %v228
        %v585 = vpop.permute.xlu0 %584
        %587 = vset.pattern.permute.xlu0 0
        %588 = vperm.xlu0 %587, %v229
        %v589 = vpop.permute.xlu0 %588
        %591 = vset.pattern.permute.xlu0 0
        %592 = vperm.xlu0 %591, %v230
        %v593 = vpop.permute.xlu0 %592
        %v595 = vsel %vm562, %v565, %v545
        %v596 = vsel %vm562, %v569, %v547
        %v597 = vsel %vm562, %v573, %v549
        %v598 = vsel %vm562, %v577, %v551
        %v599 = vsel %vm562, %v581, %v553
        %v600 = vsel %vm562, %v585, %v555
        %v601 = vsel %vm562, %v589, %v557
        %v602 = vsel %vm562, %v593, %v559
        %v603 = vadd.f32 %v536, %v595
        %v604 = vadd.f32 %v537, %v596
        %v605 = vadd.f32 %v538, %v597
        %v606 = vadd.f32 %v539, %v598
        %v607 = vadd.f32 %v540, %v599
        %v608 = vadd.f32 %v541, %v600
        %v609 = vadd.f32 %v542, %v601
        %v610 = vadd.f32 %v543, %v602
        %v611 = vmul.f32 %v603, %v451
        %v612 = vmul.f32 %v604, %v452
        %v613 = vmul.f32 %v605, %v453
        %v614 = vmul.f32 %v606, %v454
        %v615 = vmul.f32 %v607, %v451
        %v616 = vmul.f32 %v608, %v452
        %v617 = vmul.f32 %v609, %v453
        %v618 = vmul.f32 %v610, %v454
        %v619 = vadd.f32 %v469, %v611
        %v620 = vadd.f32 %v470, %v612
        %v621 = vadd.f32 %v471, %v613
        %v622 = vadd.f32 %v472, %v614
        %v623 = vadd.f32 %v473, %v615
        %v624 = vadd.f32 %v474, %v616
        %v625 = vadd.f32 %v475, %v617
        %v626 = vadd.f32 %v476, %v618
        %627 = vrot.lane.b32.xlu0 %v223, 126
        %v628 = vpop.permute.xlu0 %627
        %629 = vrot.lane.b32.xlu0 %v224, 126
        %v630 = vpop.permute.xlu0 %629
        %631 = vrot.lane.b32.xlu0 %v225, 126
        %v632 = vpop.permute.xlu0 %631
        %633 = vrot.lane.b32.xlu0 %v226, 126
        %v634 = vpop.permute.xlu0 %633
        %635 = vrot.lane.b32.xlu0 %v227, 126
        %v636 = vpop.permute.xlu0 %635
        %637 = vrot.lane.b32.xlu0 %v228, 126
        %v638 = vpop.permute.xlu0 %637
        %639 = vrot.lane.b32.xlu0 %v229, 126
        %v640 = vpop.permute.xlu0 %639
        %641 = vrot.lane.b32.xlu0 %v230, 126
        %v642 = vpop.permute.xlu0 %641
        %vm643 = vcmp.ge.s32.totalorder %v468, 126
        %v644 = vsel %vm643, 1, 0
        %vm645 = vcmp.eq.s32.totalorder %v644, 1
        %v646 = vsel %vm645, %v499, %v628
        %v647 = vsel %vm645, %v504, %v630
        %v648 = vsel %vm645, %v509, %v632
        %v649 = vsel %vm645, %v514, %v634
        %v650 = vsel %vm645, %v519, %v636
        %v651 = vsel %vm645, %v524, %v638
        %v652 = vsel %vm645, %v529, %v640
        %v653 = vsel %vm645, %v534, %v642
        %654 = vrot.lane.b32.xlu0 %v223, 2
        %v655 = vpop.permute.xlu0 %654
        %656 = vrot.lane.b32.xlu0 %v224, 2
        %v657 = vpop.permute.xlu0 %656
        %658 = vrot.lane.b32.xlu0 %v225, 2
        %v659 = vpop.permute.xlu0 %658
        %660 = vrot.lane.b32.xlu0 %v226, 2
        %v661 = vpop.permute.xlu0 %660
        %662 = vrot.lane.b32.xlu0 %v227, 2
        %v663 = vpop.permute.xlu0 %662
        %664 = vrot.lane.b32.xlu0 %v228, 2
        %v665 = vpop.permute.xlu0 %664
        %666 = vrot.lane.b32.xlu0 %v229, 2
        %v667 = vpop.permute.xlu0 %666
        %668 = vrot.lane.b32.xlu0 %v230, 2
        %v669 = vpop.permute.xlu0 %668
        %vm670 = vcmp.lt.s32.totalorder %v468, 2
        %v671 = vsel %vm670, 1, 0
        %vm672 = vcmp.eq.s32.totalorder %v671, 1
        %v673 = vsel %vm672, %v565, %v655
        %v674 = vsel %vm672, %v569, %v657
        %v675 = vsel %vm672, %v573, %v659
        %v676 = vsel %vm672, %v577, %v661
        %v677 = vsel %vm672, %v581, %v663
        %v678 = vsel %vm672, %v585, %v665
        %v679 = vsel %vm672, %v589, %v667
        %v680 = vsel %vm672, %v593, %v669
        %v681 = vadd.f32 %v646, %v673
        %v682 = vadd.f32 %v647, %v674
        %v683 = vadd.f32 %v648, %v675
        %v684 = vadd.f32 %v649, %v676
        %v685 = vadd.f32 %v650, %v677
        %v686 = vadd.f32 %v651, %v678
        %v687 = vadd.f32 %v652, %v679
        %v688 = vadd.f32 %v653, %v680
        %v689 = vmul.f32 %v681, %v455
        %v690 = vmul.f32 %v682, %v456
        %v691 = vmul.f32 %v683, %v457
        %v692 = vmul.f32 %v684, %v458
        %v693 = vmul.f32 %v685, %v455
        %v694 = vmul.f32 %v686, %v456
        %v695 = vmul.f32 %v687, %v457
        %v696 = vmul.f32 %v688, %v458
        %v697 = vadd.f32 %v619, %v689
        %v698 = vadd.f32 %v620, %v690
        %v699 = vadd.f32 %v621, %v691
        %v700 = vadd.f32 %v622, %v692
        %v701 = vadd.f32 %v623, %v693
        %v702 = vadd.f32 %v624, %v694
        %v703 = vadd.f32 %v625, %v695
        %v704 = vadd.f32 %v626, %v696
        %705 = vrot.lane.b32.xlu0 %v223, 125
        %v706 = vpop.permute.xlu0 %705
        %707 = vrot.lane.b32.xlu0 %v224, 125
        %v708 = vpop.permute.xlu0 %707
        %709 = vrot.lane.b32.xlu0 %v225, 125
        %v710 = vpop.permute.xlu0 %709
        %711 = vrot.lane.b32.xlu0 %v226, 125
        %v712 = vpop.permute.xlu0 %711
        %713 = vrot.lane.b32.xlu0 %v227, 125
        %v714 = vpop.permute.xlu0 %713
        %715 = vrot.lane.b32.xlu0 %v228, 125
        %v716 = vpop.permute.xlu0 %715
        %717 = vrot.lane.b32.xlu0 %v229, 125
        %v718 = vpop.permute.xlu0 %717
        %719 = vrot.lane.b32.xlu0 %v230, 125
        %v720 = vpop.permute.xlu0 %719
        %vm721 = vcmp.ge.s32.totalorder %v468, 125
        %v722 = vsel %vm721, 1, 0
        %vm723 = vcmp.eq.s32.totalorder %v722, 1
        %v724 = vsel %vm723, %v499, %v706
        %v725 = vsel %vm723, %v504, %v708
        %v726 = vsel %vm723, %v509, %v710
        %v727 = vsel %vm723, %v514, %v712
        %v728 = vsel %vm723, %v519, %v714
        %v729 = vsel %vm723, %v524, %v716
        %v730 = vsel %vm723, %v529, %v718
        %v731 = vsel %vm723, %v534, %v720
        %732 = vrot.lane.b32.xlu0 %v223, 3
        %v733 = vpop.permute.xlu0 %732
        %734 = vrot.lane.b32.xlu0 %v224, 3
        %v735 = vpop.permute.xlu0 %734
        %736 = vrot.lane.b32.xlu0 %v225, 3
        %v737 = vpop.permute.xlu0 %736
        %738 = vrot.lane.b32.xlu0 %v226, 3
        %v739 = vpop.permute.xlu0 %738
        %740 = vrot.lane.b32.xlu0 %v227, 3
        %v741 = vpop.permute.xlu0 %740
        %742 = vrot.lane.b32.xlu0 %v228, 3
        %v743 = vpop.permute.xlu0 %742
        %744 = vrot.lane.b32.xlu0 %v229, 3
        %v745 = vpop.permute.xlu0 %744
        %746 = vrot.lane.b32.xlu0 %v230, 3
        %v747 = vpop.permute.xlu0 %746
        %vm748 = vcmp.lt.s32.totalorder %v468, 3
        %v749 = vsel %vm748, 1, 0
        %vm750 = vcmp.eq.s32.totalorder %v749, 1
        %v751 = vsel %vm750, %v565, %v733
        %v752 = vsel %vm750, %v569, %v735
        %v753 = vsel %vm750, %v573, %v737
        %v754 = vsel %vm750, %v577, %v739
        %v755 = vsel %vm750, %v581, %v741
        %v756 = vsel %vm750, %v585, %v743
        %v757 = vsel %vm750, %v589, %v745
        %v758 = vsel %vm750, %v593, %v747
        %v759 = vadd.f32 %v724, %v751
        %v760 = vadd.f32 %v725, %v752
        %v761 = vadd.f32 %v726, %v753
        %v762 = vadd.f32 %v727, %v754
        %v763 = vadd.f32 %v728, %v755
        %v764 = vadd.f32 %v729, %v756
        %v765 = vadd.f32 %v730, %v757
        %v766 = vadd.f32 %v731, %v758
        %v767 = vmul.f32 %v759, %v459
        %v768 = vmul.f32 %v760, %v460
        %v769 = vmul.f32 %v761, %v461
        %v770 = vmul.f32 %v762, %v462
        %v771 = vmul.f32 %v763, %v459
        %v772 = vmul.f32 %v764, %v460
        %v773 = vmul.f32 %v765, %v461
        %v774 = vmul.f32 %v766, %v462
        %v775 = vadd.f32 %v697, %v767
        %v776 = vadd.f32 %v698, %v768
        %v777 = vadd.f32 %v699, %v769
        %v778 = vadd.f32 %v700, %v770
        %v779 = vadd.f32 %v701, %v771
        %v780 = vadd.f32 %v702, %v772
        %v781 = vadd.f32 %v703, %v773
        %v782 = vadd.f32 %v704, %v774
        %783 = vrot.lane.b32.xlu0 %v223, 124
        %v784 = vpop.permute.xlu0 %783
        %785 = vrot.lane.b32.xlu0 %v224, 124
        %v786 = vpop.permute.xlu0 %785
        %787 = vrot.lane.b32.xlu0 %v225, 124
        %v788 = vpop.permute.xlu0 %787
        %789 = vrot.lane.b32.xlu0 %v226, 124
        %v790 = vpop.permute.xlu0 %789
        %791 = vrot.lane.b32.xlu0 %v227, 124
        %v792 = vpop.permute.xlu0 %791
        %793 = vrot.lane.b32.xlu0 %v228, 124
        %v794 = vpop.permute.xlu0 %793
        %795 = vrot.lane.b32.xlu0 %v229, 124
        %v796 = vpop.permute.xlu0 %795
        %797 = vrot.lane.b32.xlu0 %v230, 124
        %v798 = vpop.permute.xlu0 %797
        %vm799 = vcmp.ge.s32.totalorder %v468, 124
        %v800 = vsel %vm799, 1, 0
        %vm801 = vcmp.eq.s32.totalorder %v800, 1
        %v802 = vsel %vm801, %v499, %v784
        %v803 = vsel %vm801, %v504, %v786
        %v804 = vsel %vm801, %v509, %v788
        %v805 = vsel %vm801, %v514, %v790
        %v806 = vsel %vm801, %v519, %v792
        %v807 = vsel %vm801, %v524, %v794
        %v808 = vsel %vm801, %v529, %v796
        %v809 = vsel %vm801, %v534, %v798
        %810 = vrot.lane.b32.xlu0 %v223, 4
        %v811 = vpop.permute.xlu0 %810
        %812 = vrot.lane.b32.xlu0 %v224, 4
        %v813 = vpop.permute.xlu0 %812
        %814 = vrot.lane.b32.xlu0 %v225, 4
        %v815 = vpop.permute.xlu0 %814
        %816 = vrot.lane.b32.xlu0 %v226, 4
        %v817 = vpop.permute.xlu0 %816
        %818 = vrot.lane.b32.xlu0 %v227, 4
        %v819 = vpop.permute.xlu0 %818
        %820 = vrot.lane.b32.xlu0 %v228, 4
        %v821 = vpop.permute.xlu0 %820
        %822 = vrot.lane.b32.xlu0 %v229, 4
        %v823 = vpop.permute.xlu0 %822
        %824 = vrot.lane.b32.xlu0 %v230, 4
        %v825 = vpop.permute.xlu0 %824
        %vm826 = vcmp.lt.s32.totalorder %v468, 4
        %v827 = vsel %vm826, 1, 0
        %vm828 = vcmp.eq.s32.totalorder %v827, 1
        %v829 = vsel %vm828, %v565, %v811
        %v830 = vsel %vm828, %v569, %v813
        %v831 = vsel %vm828, %v573, %v815
        %v832 = vsel %vm828, %v577, %v817
        %v833 = vsel %vm828, %v581, %v819
        %v834 = vsel %vm828, %v585, %v821
        %v835 = vsel %vm828, %v589, %v823
        %v836 = vsel %vm828, %v593, %v825
        %v837 = vadd.f32 %v802, %v829
        %v838 = vadd.f32 %v803, %v830
        %v839 = vadd.f32 %v804, %v831
        %v840 = vadd.f32 %v805, %v832
        %v841 = vadd.f32 %v806, %v833
        %v842 = vadd.f32 %v807, %v834
        %v843 = vadd.f32 %v808, %v835
        %v844 = vadd.f32 %v809, %v836
        %v845 = vmul.f32 %v837, %v463
        %v846 = vmul.f32 %v838, %v464
        %v847 = vmul.f32 %v839, %v465
        %v848 = vmul.f32 %v840, %v466
        %v849 = vmul.f32 %v841, %v463
        %v850 = vmul.f32 %v842, %v464
        %v851 = vmul.f32 %v843, %v465
        %v852 = vmul.f32 %v844, %v466
        %v853 = vadd.f32 %v775, %v845
        %v854 = vadd.f32 %v776, %v846
        %v855 = vadd.f32 %v777, %v847
        %v856 = vadd.f32 %v778, %v848
        %v857 = vadd.f32 %v779, %v849
        %v858 = vadd.f32 %v780, %v850
        %v859 = vadd.f32 %v781, %v851
        %v860 = vadd.f32 %v782, %v852
        %861 = vst [vmem:[%s220] sm:$0xff] %v853
        %862 = vst [vmem:[%s220 + $0x8] sm:$0xff] %v854
        %863 = vst [vmem:[%s220 + $0x10] sm:$0xff] %v855
        %864 = vst [vmem:[%s220 + $0x18] sm:$0xff] %v856
        %865 = vst [vmem:[%s220 + $0x20] sm:$0xff] %v857
        %866 = vst [vmem:[%s220 + $0x28] sm:$0xff] %v858
        %867 = vst [vmem:[%s220 + $0x30] sm:$0xff] %v859
        %868 = vst [vmem:[%s220 + $0x38] sm:$0xff] %v860
        %s869 = sand.u32 %s98, 1
        %s870 = scalar_lea.sflag [#allocation4], %s869
        %s871 = sand.u32 %s98, 1
        %s872 = smul.addr %s871, 64
        %s873 = scalar_lea.vmem [#allocation7], %s872
        // Predicated region
        $region37: #{tpu_custom_call.1} parent=27 // pred_check
          %p874 = pneg %p108
        $region38: #{tpu_custom_call.1} parent=27 // pred_check_branch
          %876 = sbr.rel (%p874) target = $region40
        $region39: #{tpu_custom_call.1} parent=27 // pred_region
          %s877 = smul.u32 2, %s27
          %s879 = ssub.s32 1024, 1024
          %880 = vsyncadd %s870, %s879
          %s881 = smul.addr %s877, 4
          %s882 = smul.addr %s26, 16
          %s883 = sadd.s32 %s881, %s882
          %s884 = smul.addr %s883, 128
          %s885 = scalar_lea.hbm %s2, %s884
          %s886 = sshll.u32 %s873, 4
          %s887 = int_to_ptr.vmem [resolvable:$true] %s886
          %892 = dma.vmem_to_hbm [thread:$0]  %s887, 1024, %s885, %s870, 128, 128, 8
        $region40: #{tpu_custom_call.1} parent=27 // pred_fallthru
          _
      $region28: #{tpu_custom_call.1} parent=5 // pred_fallthru
        _
      %p893 = scmp.le.s32.totalorder 2, %s17
      // Predicated region
      $region41: #{tpu_custom_call.1} parent=5 // pred_check
        %p894 = pneg %p893
      $region42: #{tpu_custom_call.1} parent=5 // pred_check_branch
        %896 = sbr.rel (%p894) target = $region44
      $region43: #{tpu_custom_call.1} parent=5 // pred_region
        %s897 = ssub.s32 %s17, 2
        // Predicated region
        $region45: #{tpu_custom_call.1} parent=43 // pred_check
          %p898 = pneg %p114
        $region46: #{tpu_custom_call.1} parent=43 // pred_check_branch
          %900 = sbr.rel (%p898) target = $region48
        $region47: #{tpu_custom_call.1} parent=43 // pred_region
          %s901 = sand.u32 %s99, 1
          %s902 = scalar_lea.sflag [#allocation4], %s901
          %s903 = sand.u32 %s99, 1
          %s904 = smul.addr %s903, 64
          %s905 = scalar_lea.vmem [#allocation7], %s904
          %906 = dma.done %s902, 1024
        $region48: #{tpu_custom_call.1} parent=43 // pred_fallthru
          _
      $region44: #{tpu_custom_call.1} parent=5 // pred_fallthru
        _
    $region6: #{tpu_custom_call.1} parent=1 // loop_footer
      %s21 = sadd.s32 1, %s17
    $region7: #{tpu_custom_call.1} parent=1 // loop_footer_branch
      %16 = sbr.rel target = $region3
    $region8: #{tpu_custom_call.1} parent=1 // loop_exit
      _
    %907 = vsyncpa [#allocation3], 1
    %s908 = scalar_lea.sflag [#allocation3], 1
    %909 = vsyncpa %s908, 1
    %910 = vsyncpa [#allocation6], 1
    %s911 = scalar_lea.sflag [#allocation6], 1
    %912 = vsyncpa %s911, 1
    %913 = vsyncpa [#allocation4], 1
    %s914 = scalar_lea.sflag [#allocation4], 1
    %915 = vsyncpa %s914, 1

</llo_original>
